<compile_context>
chip_gen: v5e
topology: v5e:2x2
jax: 0.10.0
libtpu: 0.0.40
codegen_flags: <defaults>
</compile_context>

<pallas_src>
import jax
import jax.numpy as jnp
from jax.experimental import pallas as pl
from jax.experimental.pallas import tpu as pltpu


def _round_up(x, m):
    return ((x + m - 1) // m) * m


def _sublane_align(dtype):
    # f32 -> 8, bf16 -> 16, int8/fp8 -> 32 (sub-32-bit dtypes pack along sublanes).
    return max(8, 32 // jnp.dtype(dtype).itemsize)


def _pick_tile(dim, preferred, align):
    """Largest multiple of `align` that is <= preferred and divides `dim`.
    `dim` must already be a multiple of `align` (guaranteed by padding)."""
    t = max(align, (min(preferred, dim) // align) * align)
    while dim % t:
        t -= align
    return t


# ---------------------------------------------------------------------------
# Kernels
# ---------------------------------------------------------------------------

def _linear_kernel_f32_out(x_ref, w_ref, b_ref, o_ref):
    """f32 output: accumulate directly into the resident output block.
    Bias is folded into the k==0 init (no epilogue add, no scratch)."""
    k = pl.program_id(2)

    @pl.when(k == 0)
    def _():
        o_ref[...] = jnp.broadcast_to(b_ref[...], o_ref.shape)

    o_ref[...] += jnp.dot(x_ref[...], w_ref[...],
                          preferred_element_type=jnp.float32)


def _linear_kernel_acc(x_ref, w_ref, b_ref, o_ref, acc_ref):
    """Generic path (non-f32 output): f32 VMEM accumulator + final cast."""
    k = pl.program_id(2)

    @pl.when(k == 0)
    def _():
        acc_ref[...] = jnp.broadcast_to(b_ref[...], acc_ref.shape)

    acc_ref[...] += jnp.dot(x_ref[...], w_ref[...],
                            preferred_element_type=jnp.float32)

    @pl.when(k == pl.num_programs(2) - 1)
    def _():
        o_ref[...] = acc_ref[...].astype(o_ref.dtype)


# ---------------------------------------------------------------------------
# Wrappers
# ---------------------------------------------------------------------------

def prepare_params(weight, bias, *, compute_dtype=None):
    """One-time (outside the hot path) conversion of PyTorch nn.Linear params.

    weight: (out_dim, in_dim)  ->  (K_pad, N_pad), lane axis = out_dim
    bias:   (out_dim,)         ->  (1, N_pad) float32
    Padding to multiples of 128 keeps every lane tile dense (no masked stores).
    """
    out_dim, in_dim = weight.shape
    k_pad = _round_up(in_dim, 128)
    n_pad = _round_up(out_dim, 128)
    w_kn = jnp.transpose(weight)  # single transpose here, NOT per forward call
    if (k_pad, n_pad) != (in_dim, out_dim):
        w_kn = jnp.pad(w_kn, ((0, k_pad - in_dim), (0, n_pad - out_dim)))
    if compute_dtype is not None:
        w_kn = w_kn.astype(compute_dtype)  # e.g. jnp.bfloat16 for MXU-native compute
    b2d = jnp.pad(bias.astype(jnp.float32), (0, n_pad - out_dim)).reshape(1, n_pad)
    return w_kn, b2d, out_dim, in_dim


def linear_norm(x, w_kn, b2d, out_dim, *, tm=256, tn=512, tk=1024,
                vmem_budget=20 * 1024 * 1024):
    """Forward pass of LinearNorm: flatten(x) @ W.T + b.

    `w_kn`, `b2d`, `out_dim` come from `prepare_params` (pre-transposed,
    lane-padded weight/bias).
    """
    batch = x.shape[0]
    x2 = x.reshape(batch, -1)                    # nn.Flatten (free, contiguous)
    m, k_in = x2.shape
    k_pad, n_pad = w_kn.shape
    assert 0 <= k_pad - k_in < 128, f"in_dim mismatch: x has {k_in}, weight has {k_pad}"

    out_dtype = x.dtype
    if x2.dtype != w_kn.dtype:                   # optional bf16 compute path
        x2 = x2.astype(w_kn.dtype)

    # Pad M up to the sublane minimum: tiny batches would otherwise force
    # masked sublane handling and underfill the MXU rows even more.
    sub = _sublane_align(x2.dtype)
    m_pad = _round_up(max(m, sub), sub)
    if (m_pad, k_pad) != (m, k_in):
        x2 = jnp.pad(x2, ((0, m_pad - m), (0, k_pad - k_in)))

    # Tile selection: 256-aligned where the (padded) dims allow it, to fill
    # the 256-wide MXU on v6e/v7x; 128 otherwise; sublane-aligned on M.
    n_align = 256 if n_pad % 256 == 0 else 128
    k_align = 256 if k_pad % 256 == 0 else 128
    tm = _pick_tile(m_pad, tm, sub)
    tn = _pick_tile(n_pad, tn, n_align)
    tk = _pick_tile(k_pad, tk, k_align)

    x_b = jnp.dtype(x2.dtype).itemsize
    w_b = jnp.dtype(w_kn.dtype).itemsize
    o_b = jnp.dtype(out_dtype).itemsize
    use_acc = out_dtype != jnp.float32

    def footprint(tm_, tn_, tk_):
        fp = 2 * tm_ * tk_ * x_b + 2 * tk_ * tn_ * w_b      # x, w (double-buffered)
        fp += 2 * tn_ * 4 + 2 * tm_ * tn_ * o_b             # bias, output
        if use_acc:
            fp += tm_ * tn_ * 4
        return fp

    # Shrink tiles if needed to stay inside the VMEM budget (budget chosen to
    # fit v7x's 64 MiB physical / 32 MiB scoped VMEM with headroom).
    while footprint(tm, tn, tk) > vmem_budget:
        if tk > k_align:
            tk = _pick_tile(k_pad, tk // 2, k_align)
        elif tm > sub:
            tm = _pick_tile(m_pad, tm // 2, sub)
        elif tn > n_align:
            tn = _pick_tile(n_pad, tn // 2, n_align)
        else:
            break

    grid = (m_pad // tm, n_pad // tn, k_pad // tk)
    # NOTE(v7x): for tiny problems (grid[0]*grid[1] == 1) the second TensorCore
    # is idle; the whole problem then fits a single VMEM block, so this is the
    # cheap/low-overhead regime anyway.

    cost = pl.CostEstimate(
        flops=2 * m_pad * n_pad * k_pad,
        transcendentals=0,
        bytes_accessed=(m_pad * k_pad * x_b + k_pad * n_pad * w_b
                        + n_pad * 4 + m_pad * n_pad * o_b),
    )

    kernel = _linear_kernel_acc if use_acc else _linear_kernel_f32_out
    scratch = [pltpu.VMEM((tm, tn), jnp.float32)] if use_acc else []

    out_full = pl.pallas_call(
        kernel,
        out_shape=jax.ShapeDtypeStruct((m_pad, n_pad), out_dtype),
        grid_spec=pltpu.PrefetchScalarGridSpec(
            num_scalar_prefetch=0,
            grid=grid,
            in_specs=[
                pl.BlockSpec((tm, tk), lambda i, j, k: (i, k)),
                # (On v5e, pipeline_mode=pl.Buffered(3) on this weight spec can
                #  hide residual weight-stream DMA latency once tk is large.)
                pl.BlockSpec((tk, tn), lambda i, j, k: (k, j)),
                pl.BlockSpec((1, tn), lambda i, j, k: (0, j)),
            ],
            out_specs=pl.BlockSpec((tm, tn), lambda i, j, k: (i, j)),
            scratch_shapes=scratch,
        ),
        compiler_params=pltpu.CompilerParams(
            dimension_semantics=("parallel", "parallel", "arbitrary"),
            vmem_limit_bytes=32 * 1024 * 1024,
        ),
        cost_estimate=cost,
    )(x2, w_kn, b2d)

    return out_full[:m, :out_dim]


if __name__ == "__main__":
    key = jax.random.PRNGKey(0)
    kx, kw, kb = jax.random.split(key, 3)

    # Small shapes consistent with the module: the Linear consumes the
    # flattened input, so in_dim = 4*16*16 = 1024; out_dim chosen lane-dense.
    B, C, H, W = 2, 4, 16, 16
    in_dim = C * H * W
    out_dim = 128

    x = jax.random.normal(kx, (B, C, H, W), dtype=jnp.float32)
    # Xavier-normal init (gain=1 for 'linear'), matching the PyTorch module.
    std = (2.0 / (in_dim + out_dim)) ** 0.5
    weight = std * jax.random.normal(kw, (out_dim, in_dim), dtype=jnp.float32)
    bias = 0.01 * jax.random.normal(kb, (out_dim,), dtype=jnp.float32)

    # One-time parameter preparation (weight transpose/pad cached OUTSIDE the
    # hot path, per performance review).
    w_kn, b2d, n_out, n_in = prepare_params(weight, bias)

    fwd = jax.jit(lambda xx: linear_norm(xx, w_kn, b2d, n_out))
    out = jax.block_until_ready(fwd(x))

    # Pure-JAX reference.
    ref = x.reshape(B, -1) @ weight.T + bias
    assert out.shape == ref.shape, (out.shape, ref.shape)
    assert jnp.allclose(out, ref, atol=1e-4, rtol=1e-4), \
        float(jnp.max(jnp.abs(out - ref)))

    print("KERNEL_OK")
</pallas_src>

<mosaic_0001>
module attributes {stable_mosaic.version = 11 : i64} {
  func.func @_linear_kernel_f32_out(%arg0: i32, %arg1: i32, %arg2: i32, %arg3: memref<8x1024xf32, #tpu.memory_space<vmem>>, %arg4: memref<1024x128xf32, #tpu.memory_space<vmem>>, %arg5: memref<1x128xf32, #tpu.memory_space<vmem>>, %arg6: memref<8x128xf32, #tpu.memory_space<vmem>>) attributes {dimension_semantics = [#tpu.dimension_semantics<parallel>, #tpu.dimension_semantics<parallel>, #tpu.dimension_semantics<arbitrary>], iteration_bounds = array<i64: 1, 1, 1>, scalar_prefetch = 0 : i64, scratch_operands = 0 : i64, tpu.core_type = #tpu.core_type<tc>, window_params = [{transform_indices = @transform_0, window_bounds = array<i64: 8, 1024>}, {transform_indices = @transform_1, window_bounds = array<i64: 1024, 128>}, {transform_indices = @transform_2, window_bounds = array<i64: 1, 128>}, {transform_indices = @transform_3, window_bounds = array<i64: 8, 128>}]} {
    %c0_i32 = arith.constant 0 : i32
    %0 = arith.cmpi eq, %arg2, %c0_i32 : i32
    %1 = arith.extui %0 : i1 to i32
    %c0_i32_0 = arith.constant 0 : i32
    %2 = arith.cmpi ne, %1, %c0_i32_0 : i32
    scf.if %2 {
      %c0_8 = arith.constant 0 : index
      %c0_9 = arith.constant 0 : index
      %9 = vector.load %arg5[%c0_8, %c0_9] : memref<1x128xf32, #tpu.memory_space<vmem>>, vector<1x128xf32>
      %10 = vector.shape_cast %9 : vector<1x128xf32> to vector<1x128xf32>
      %11 = vector.broadcast %10 : vector<1x128xf32> to vector<8x128xf32>
      %c0_10 = arith.constant 0 : index
      %c0_11 = arith.constant 0 : index
      %12 = vector.load %arg6[%c0_10, %c0_11] : memref<8x128xf32, #tpu.memory_space<vmem>>, vector<8x128xf32>
      tpu.vector_store %arg6[%c0_10, %c0_11], %11 {strides = array<i32>} : memref<8x128xf32, #tpu.memory_space<vmem>>, vector<8x128xf32>,
    } else {
    }
    %c0 = arith.constant 0 : index
    %c0_1 = arith.constant 0 : index
    %3 = vector.load %arg6[%c0, %c0_1] : memref<8x128xf32, #tpu.memory_space<vmem>>, vector<8x128xf32>
    %c0_2 = arith.constant 0 : index
    %c0_3 = arith.constant 0 : index
    %4 = vector.load %arg3[%c0_2, %c0_3] : memref<8x1024xf32, #tpu.memory_space<vmem>>, vector<8x1024xf32>
    %c0_4 = arith.constant 0 : index
    %c0_5 = arith.constant 0 : index
    %5 = vector.load %arg4[%c0_4, %c0_5] : memref<1024x128xf32, #tpu.memory_space<vmem>>, vector<1024x128xf32>
    %cst = arith.constant dense<0.000000e+00> : vector<8x128xf32>
    %6 = tpu.matmul %4, %5, %cst {dimension_numbers = #tpu.dot_dimension_numbers<[1], [0], [0], [1], [0, 0, 1, 1], [], []>} : vector<8x1024xf32>, vector<1024x128xf32>, vector<8x128xf32> -> vector<8x128xf32>
    %7 = arith.addf %3, %6 : vector<8x128xf32>
    %c0_6 = arith.constant 0 : index
    %c0_7 = arith.constant 0 : index
    %8 = vector.load %arg6[%c0_6, %c0_7] : memref<8x128xf32, #tpu.memory_space<vmem>>, vector<8x128xf32>
    tpu.vector_store %arg6[%c0_6, %c0_7], %7 {strides = array<i32>} : memref<8x128xf32, #tpu.memory_space<vmem>>, vector<8x128xf32>,
    return
  }
  func.func @transform_0(%arg0: i32, %arg1: i32, %arg2: i32) -> (i32, i32) {
    %c0_i32 = arith.constant 0 : i32
    return %arg0, %arg2 : i32, i32
  }
  func.func @transform_1(%arg0: i32, %arg1: i32, %arg2: i32) -> (i32, i32) {
    %c0_i32 = arith.constant 0 : i32
    return %arg2, %arg1 : i32, i32
  }
  func.func @transform_2(%arg0: i32, %arg1: i32, %arg2: i32) -> (i32, i32) {
    %c0_i32 = arith.constant 0 : i32
    %c0_i32_0 = arith.constant 0 : i32
    return %c0_i32, %arg1 : i32, i32
  }
  func.func @transform_3(%arg0: i32, %arg1: i32, %arg2: i32) -> (i32, i32) {
    %c0_i32 = arith.constant 0 : i32
    return %arg0, %arg1 : i32, i32
  }
}

</mosaic_0001>

<llo_original>
// kernel: _lambda_.1
$region0: #{_lambda_.1}
  #allocation0 [shape = 'u32[]', space=smem, size = 0x4, offset = 0x4, fixed_abs, tag = 'smem constant byte address 0x4 - core index']
  #allocation1 [shape = 'u32[72,128]{1,0:T(1,128)}', space=vmem, size = 0x9000, scoped, tag = 'internal scratch']
  %s0 = inlined_call_operand.vmem [shape: f32[8,1024], index: 0, kind: input, shape index: {}]
  %s1 = inlined_call_operand.hbm [shape: f32[1024,128], index: 1, kind: input, shape index: {}]
  %s2 = inlined_call_operand.vmem [shape: f32[1,128], index: 2, kind: input, shape index: {}]
  %s3 = inlined_call_operand.vmem [shape: f32[8,128], index: 3, kind: output, shape index: {}]
  %s4 = sld [smem:[#allocation0]]
  $region30: #{_lambda_.1} parent=0
    _
  %s6 = ssub.s32 1, %s4
  %s7 = scalar_select 0, %s6, %s4
  $region1: #{_lambda_.1} parent=0
    #allocation2 [shape = 'u8[524288]{0}', space=vmem, size = 0x80000, scoped, tag = 'input window, operand 1, single buffered']
    #allocation3 [shape = 's32[1]{0}', space=sflag, size = 0x4, scoped, tag = 'scoped memory for _lambda_.1']
    %8 = vsyncpa [#allocation3], 0
    // Predicated region
    $region2: #{_lambda_.1} parent=1 // pred_check
      _
    $region3: #{_lambda_.1} parent=1 // pred_check_branch
      %10 = sbr.rel (0) target = $region5
    $region4: #{_lambda_.1} parent=1 // pred_region
      _
    $region5: #{_lambda_.1} parent=1 // pred_fallthru
      _
    // Predicated region
    $region6: #{_lambda_.1} parent=1 // pred_check
      _
    $region7: #{_lambda_.1} parent=1 // pred_check_branch
      %12 = sbr.rel (0) target = $region9
    $region8: #{_lambda_.1} parent=1 // pred_region
      %14 = vsyncadd [#allocation3], 0
      %s15 = sshll.u32 %s1, 4
      %s16 = int_to_ptr.hbm [resolvable:$true] %s15
      %s17 = sshll.u32 [#allocation2], 4
      %s18 = int_to_ptr.vmem [resolvable:$true] %s17
      %23 = dma.hbm_to_vmem [thread:$0]  %s16, 16384, %s18, [#allocation3], 128, 128, 8
    $region9: #{_lambda_.1} parent=1 // pred_fallthru
      _
    // Predicated region
    $region10: #{_lambda_.1} parent=1 // pred_check
      _
    $region11: #{_lambda_.1} parent=1 // pred_check_branch
      %25 = sbr.rel (0) target = $region13
    $region12: #{_lambda_.1} parent=1 // pred_region
      _
    $region13: #{_lambda_.1} parent=1 // pred_fallthru
      _
    // Predicated region
    $region14: #{_lambda_.1} parent=1 // pred_check
      _
    $region15: #{_lambda_.1} parent=1 // pred_check_branch
      %27 = sbr.rel (0) target = $region17
    $region16: #{_lambda_.1} parent=1 // pred_region
      %29 = dma.done [#allocation3], 16384
    $region17: #{_lambda_.1} parent=1 // pred_fallthru
      _
    %p30 = scmp.eq.s32.totalorder 0, 0
    // Predicated region
    $region18: #{_lambda_.1} parent=1 // pred_check
      %p31 = pneg %p30
    $region19: #{_lambda_.1} parent=1 // pred_check_branch
      %33 = sbr.rel (%p31) target = $region21
    $region20: #{_lambda_.1} parent=1 // pred_region
      %v34 = vld [vmem:[%s2] sm:$0x1]
      %v36 = vperm.slane %v34, 0
      %38 = vst [vmem:[%s3] sm:$0xff] %v36
    $region21: #{_lambda_.1} parent=1 // pred_fallthru
      _
    %v39 = vld [vmem:[%s3] sm:$0xff]
    %v40 = vld [vmem:[%s0] sm:$0xff]
    %v41 = vld [vmem:[%s0 + $0x8] sm:$0xff]
    %v42 = vld [vmem:[%s0 + $0x10] sm:$0xff]
    %v43 = vld [vmem:[%s0 + $0x18] sm:$0xff]
    %v44 = vld [vmem:[%s0 + $0x20] sm:$0xff]
    %v45 = vld [vmem:[%s0 + $0x28] sm:$0xff]
    %v46 = vld [vmem:[%s0 + $0x30] sm:$0xff]
    %v47 = vld [vmem:[%s0 + $0x38] sm:$0xff]
    %v48 = vld [vmem:[#allocation2] sm:$0xff]
    %v49 = vld [vmem:[#allocation2 + $0x8] sm:$0xff]
    %v50 = vld [vmem:[#allocation2 + $0x10] sm:$0xff]
    %v51 = vld [vmem:[#allocation2 + $0x18] sm:$0xff]
    %v52 = vld [vmem:[#allocation2 + $0x20] sm:$0xff]
    %v53 = vld [vmem:[#allocation2 + $0x28] sm:$0xff]
    %v54 = vld [vmem:[#allocation2 + $0x30] sm:$0xff]
    %v55 = vld [vmem:[#allocation2 + $0x38] sm:$0xff]
    %v56 = vld [vmem:[#allocation2 + $0x40] sm:$0xff]
    %v57 = vld [vmem:[#allocation2 + $0x48] sm:$0xff]
    %v58 = vld [vmem:[#allocation2 + $0x50] sm:$0xff]
    %v59 = vld [vmem:[#allocation2 + $0x58] sm:$0xff]
    %v60 = vld [vmem:[#allocation2 + $0x60] sm:$0xff]
    %v61 = vld [vmem:[#allocation2 + $0x68] sm:$0xff]
    %v62 = vld [vmem:[#allocation2 + $0x70] sm:$0xff]
    %v63 = vld [vmem:[#allocation2 + $0x78] sm:$0xff]
    %v64 = vld [vmem:[#allocation2 + $0x80] sm:$0xff]
    %v65 = vld [vmem:[#allocation2 + $0x88] sm:$0xff]
    %v66 = vld [vmem:[#allocation2 + $0x90] sm:$0xff]
    %v67 = vld [vmem:[#allocation2 + $0x98] sm:$0xff]
    %v68 = vld [vmem:[#allocation2 + $0xa0] sm:$0xff]
    %v69 = vld [vmem:[#allocation2 + $0xa8] sm:$0xff]
    %v70 = vld [vmem:[#allocation2 + $0xb0] sm:$0xff]
    %v71 = vld [vmem:[#allocation2 + $0xb8] sm:$0xff]
    %v72 = vld [vmem:[#allocation2 + $0xc0] sm:$0xff]
    %v73 = vld [vmem:[#allocation2 + $0xc8] sm:$0xff]
    %v74 = vld [vmem:[#allocation2 + $0xd0] sm:$0xff]
    %v75 = vld [vmem:[#allocation2 + $0xd8] sm:$0xff]
    %v76 = vld [vmem:[#allocation2 + $0xe0] sm:$0xff]
    %v77 = vld [vmem:[#allocation2 + $0xe8] sm:$0xff]
    %v78 = vld [vmem:[#allocation2 + $0xf0] sm:$0xff]
    %v79 = vld [vmem:[#allocation2 + $0xf8] sm:$0xff]
    %v80 = vld [vmem:[#allocation2 + $0x100] sm:$0xff]
    %v81 = vld [vmem:[#allocation2 + $0x108] sm:$0xff]
    %v82 = vld [vmem:[#allocation2 + $0x110] sm:$0xff]
    %v83 = vld [vmem:[#allocation2 + $0x118] sm:$0xff]
    %v84 = vld [vmem:[#allocation2 + $0x120] sm:$0xff]
    %v85 = vld [vmem:[#allocation2 + $0x128] sm:$0xff]
    %v86 = vld [vmem:[#allocation2 + $0x130] sm:$0xff]
    %v87 = vld [vmem:[#allocation2 + $0x138] sm:$0xff]
    %v88 = vld [vmem:[#allocation2 + $0x140] sm:$0xff]
    %v89 = vld [vmem:[#allocation2 + $0x148] sm:$0xff]
    %v90 = vld [vmem:[#allocation2 + $0x150] sm:$0xff]
    %v91 = vld [vmem:[#allocation2 + $0x158] sm:$0xff]
    %v92 = vld [vmem:[#allocation2 + $0x160] sm:$0xff]
    %v93 = vld [vmem:[#allocation2 + $0x168] sm:$0xff]
    %v94 = vld [vmem:[#allocation2 + $0x170] sm:$0xff]
    %v95 = vld [vmem:[#allocation2 + $0x178] sm:$0xff]
    %v96 = vld [vmem:[#allocation2 + $0x180] sm:$0xff]
    %v97 = vld [vmem:[#allocation2 + $0x188] sm:$0xff]
    %v98 = vld [vmem:[#allocation2 + $0x190] sm:$0xff]
    %v99 = vld [vmem:[#allocation2 + $0x198] sm:$0xff]
    %v100 = vld [vmem:[#allocation2 + $0x1a0] sm:$0xff]
    %v101 = vld [vmem:[#allocation2 + $0x1a8] sm:$0xff]
    %v102 = vld [vmem:[#allocation2 + $0x1b0] sm:$0xff]
    %v103 = vld [vmem:[#allocation2 + $0x1b8] sm:$0xff]
    %v104 = vld [vmem:[#allocation2 + $0x1c0] sm:$0xff]
    %v105 = vld [vmem:[#allocation2 + $0x1c8] sm:$0xff]
    %v106 = vld [vmem:[#allocation2 + $0x1d0] sm:$0xff]
    %v107 = vld [vmem:[#allocation2 + $0x1d8] sm:$0xff]
    %v108 = vld [vmem:[#allocation2 + $0x1e0] sm:$0xff]
    %v109 = vld [vmem:[#allocation2 + $0x1e8] sm:$0xff]
    %v110 = vld [vmem:[#allocation2 + $0x1f0] sm:$0xff]
    %v111 = vld [vmem:[#allocation2 + $0x1f8] sm:$0xff]
    %v112 = vld [vmem:[#allocation2 + $0x200] sm:$0xff]
    %v113 = vld [vmem:[#allocation2 + $0x208] sm:$0xff]
    %v114 = vld [vmem:[#allocation2 + $0x210] sm:$0xff]
    %v115 = vld [vmem:[#allocation2 + $0x218] sm:$0xff]
    %v116 = vld [vmem:[#allocation2 + $0x220] sm:$0xff]
    %v117 = vld [vmem:[#allocation2 + $0x228] sm:$0xff]
    %v118 = vld [vmem:[#allocation2 + $0x230] sm:$0xff]
    %v119 = vld [vmem:[#allocation2 + $0x238] sm:$0xff]
    %v120 = vld [vmem:[#allocation2 + $0x240] sm:$0xff]
    %v121 = vld [vmem:[#allocation2 + $0x248] sm:$0xff]
    %v122 = vld [vmem:[#allocation2 + $0x250] sm:$0xff]
    %v123 = vld [vmem:[#allocation2 + $0x258] sm:$0xff]
    %v124 = vld [vmem:[#allocation2 + $0x260] sm:$0xff]
    %v125 = vld [vmem:[#allocation2 + $0x268] sm:$0xff]
    %v126 = vld [vmem:[#allocation2 + $0x270] sm:$0xff]
    %v127 = vld [vmem:[#allocation2 + $0x278] sm:$0xff]
    %v128 = vld [vmem:[#allocation2 + $0x280] sm:$0xff]
    %v129 = vld [vmem:[#allocation2 + $0x288] sm:$0xff]
    %v130 = vld [vmem:[#allocation2 + $0x290] sm:$0xff]
    %v131 = vld [vmem:[#allocation2 + $0x298] sm:$0xff]
    %v132 = vld [vmem:[#allocation2 + $0x2a0] sm:$0xff]
    %v133 = vld [vmem:[#allocation2 + $0x2a8] sm:$0xff]
    %v134 = vld [vmem:[#allocation2 + $0x2b0] sm:$0xff]
    %v135 = vld [vmem:[#allocation2 + $0x2b8] sm:$0xff]
    %v136 = vld [vmem:[#allocation2 + $0x2c0] sm:$0xff]
    %v137 = vld [vmem:[#allocation2 + $0x2c8] sm:$0xff]
    %v138 = vld [vmem:[#allocation2 + $0x2d0] sm:$0xff]
    %v139 = vld [vmem:[#allocation2 + $0x2d8] sm:$0xff]
    %v140 = vld [vmem:[#allocation2 + $0x2e0] sm:$0xff]
    %v141 = vld [vmem:[#allocation2 + $0x2e8] sm:$0xff]
    %v142 = vld [vmem:[#allocation2 + $0x2f0] sm:$0xff]
    %v143 = vld [vmem:[#allocation2 + $0x2f8] sm:$0xff]
    %v144 = vld [vmem:[#allocation2 + $0x300] sm:$0xff]
    %v145 = vld [vmem:[#allocation2 + $0x308] sm:$0xff]
    %v146 = vld [vmem:[#allocation2 + $0x310] sm:$0xff]
    %v147 = vld [vmem:[#allocation2 + $0x318] sm:$0xff]
    %v148 = vld [vmem:[#allocation2 + $0x320] sm:$0xff]
    %v149 = vld [vmem:[#allocation2 + $0x328] sm:$0xff]
    %v150 = vld [vmem:[#allocation2 + $0x330] sm:$0xff]
    %v151 = vld [vmem:[#allocation2 + $0x338] sm:$0xff]
    %v152 = vld [vmem:[#allocation2 + $0x340] sm:$0xff]
    %v153 = vld [vmem:[#allocation2 + $0x348] sm:$0xff]
    %v154 = vld [vmem:[#allocation2 + $0x350] sm:$0xff]
    %v155 = vld [vmem:[#allocation2 + $0x358] sm:$0xff]
    %v156 = vld [vmem:[#allocation2 + $0x360] sm:$0xff]
    %v157 = vld [vmem:[#allocation2 + $0x368] sm:$0xff]
    %v158 = vld [vmem:[#allocation2 + $0x370] sm:$0xff]
    %v159 = vld [vmem:[#allocation2 + $0x378] sm:$0xff]
    %v160 = vld [vmem:[#allocation2 + $0x380] sm:$0xff]
    %v161 = vld [vmem:[#allocation2 + $0x388] sm:$0xff]
    %v162 = vld [vmem:[#allocation2 + $0x390] sm:$0xff]
    %v163 = vld [vmem:[#allocation2 + $0x398] sm:$0xff]
    %v164 = vld [vmem:[#allocation2 + $0x3a0] sm:$0xff]
    %v165 = vld [vmem:[#allocation2 + $0x3a8] sm:$0xff]
    %v166 = vld [vmem:[#allocation2 + $0x3b0] sm:$0xff]
    %v167 = vld [vmem:[#allocation2 + $0x3b8] sm:$0xff]
    %v168 = vld [vmem:[#allocation2 + $0x3c0] sm:$0xff]
    %v169 = vld [vmem:[#allocation2 + $0x3c8] sm:$0xff]
    %v170 = vld [vmem:[#allocation2 + $0x3d0] sm:$0xff]
    %v171 = vld [vmem:[#allocation2 + $0x3d8] sm:$0xff]
    %v172 = vld [vmem:[#allocation2 + $0x3e0] sm:$0xff]
    %v173 = vld [vmem:[#allocation2 + $0x3e8] sm:$0xff]
    %v174 = vld [vmem:[#allocation2 + $0x3f0] sm:$0xff]
    %v175 = vld [vmem:[#allocation2 + $0x3f8] sm:$0xff]
    %176 = vmatpush.msra.mxu0 %v63
    %177 = vmatpush.msra.mxu0 %v62
    %178 = vmatpush.msra.mxu0 %v61
    %179 = vmatpush.msra.mxu0 %v60
    %180 = vmatpush.msra.mxu0 %v59
    %181 = vmatpush.msra.mxu0 %v58
    %182 = vmatpush.msra.mxu0 %v57
    %183 = vmatpush.msra.mxu0 %v56
    %184 = vmatpush.msra.mxu0 %v55
    %185 = vmatpush.msra.mxu0 %v54
    %186 = vmatpush.msra.mxu0 %v53
    %187 = vmatpush.msra.mxu0 %v52
    %188 = vmatpush.msra.mxu0 %v51
    %189 = vmatpush.msra.mxu0 %v50
    %190 = vmatpush.msra.mxu0 %v49
    %191 = vmatpush.msra.mxu0 %v48
    %192 = vmatmul.f32.gmra.mxu0 %v40
    %v193 = vpop.f32.mrf.mxu0
    %v194 = vadd.f32 0.0, %v193
    %195 = vdwg.mxu0
    %196 = vmatpush.msra.mxu0 %v79
    %197 = vmatpush.msra.mxu0 %v78
    %198 = vmatpush.msra.mxu0 %v77
    %199 = vmatpush.msra.mxu0 %v76
    %200 = vmatpush.msra.mxu0 %v75
    %201 = vmatpush.msra.mxu0 %v74
    %202 = vmatpush.msra.mxu0 %v73
    %203 = vmatpush.msra.mxu0 %v72
    %204 = vmatpush.msra.mxu0 %v71
    %205 = vmatpush.msra.mxu0 %v70
    %206 = vmatpush.msra.mxu0 %v69
    %207 = vmatpush.msra.mxu0 %v68
    %208 = vmatpush.msra.mxu0 %v67
    %209 = vmatpush.msra.mxu0 %v66
    %210 = vmatpush.msra.mxu0 %v65
    %211 = vmatpush.msra.mxu0 %v64
    %212 = vmatmul.f32.gmra.mxu0 %v41
    %v213 = vpop.f32.mrf.mxu0
    %v214 = vadd.f32 %v194, %v213
    %215 = vdwg.mxu0
    %216 = vmatpush.msra.mxu0 %v95
    %217 = vmatpush.msra.mxu0 %v94
    %218 = vmatpush.msra.mxu0 %v93
    %219 = vmatpush.msra.mxu0 %v92
    %220 = vmatpush.msra.mxu0 %v91
    %221 = vmatpush.msra.mxu0 %v90
    %222 = vmatpush.msra.mxu0 %v89
    %223 = vmatpush.msra.mxu0 %v88
    %224 = vmatpush.msra.mxu0 %v87
    %225 = vmatpush.msra.mxu0 %v86
    %226 = vmatpush.msra.mxu0 %v85
    %227 = vmatpush.msra.mxu0 %v84
    %228 = vmatpush.msra.mxu0 %v83
    %229 = vmatpush.msra.mxu0 %v82
    %230 = vmatpush.msra.mxu0 %v81
    %231 = vmatpush.msra.mxu0 %v80
    %232 = vmatmul.f32.gmra.mxu0 %v42
    %v233 = vpop.f32.mrf.mxu0
    %v234 = vadd.f32 %v214, %v233
    %235 = vdwg.mxu0
    %236 = vmatpush.msra.mxu0 %v111
    %237 = vmatpush.msra.mxu0 %v110
    %238 = vmatpush.msra.mxu0 %v109
    %239 = vmatpush.msra.mxu0 %v108
    %240 = vmatpush.msra.mxu0 %v107
    %241 = vmatpush.msra.mxu0 %v106
    %242 = vmatpush.msra.mxu0 %v105
    %243 = vmatpush.msra.mxu0 %v104
    %244 = vmatpush.msra.mxu0 %v103
    %245 = vmatpush.msra.mxu0 %v102
    %246 = vmatpush.msra.mxu0 %v101
    %247 = vmatpush.msra.mxu0 %v100
    %248 = vmatpush.msra.mxu0 %v99
    %249 = vmatpush.msra.mxu0 %v98
    %250 = vmatpush.msra.mxu0 %v97
    %251 = vmatpush.msra.mxu0 %v96
    %252 = vmatmul.f32.gmra.mxu0 %v43
    %v253 = vpop.f32.mrf.mxu0
    %v254 = vadd.f32 %v234, %v253
    %255 = vdwg.mxu0
    %256 = vmatpush.msra.mxu0 %v127
    %257 = vmatpush.msra.mxu0 %v126
    %258 = vmatpush.msra.mxu0 %v125
    %259 = vmatpush.msra.mxu0 %v124
    %260 = vmatpush.msra.mxu0 %v123
    %261 = vmatpush.msra.mxu0 %v122
    %262 = vmatpush.msra.mxu0 %v121
    %263 = vmatpush.msra.mxu0 %v120
    %264 = vmatpush.msra.mxu0 %v119
    %265 = vmatpush.msra.mxu0 %v118
    %266 = vmatpush.msra.mxu0 %v117
    %267 = vmatpush.msra.mxu0 %v116
    %268 = vmatpush.msra.mxu0 %v115
    %269 = vmatpush.msra.mxu0 %v114
    %270 = vmatpush.msra.mxu0 %v113
    %271 = vmatpush.msra.mxu0 %v112
    %272 = vmatmul.f32.gmra.mxu0 %v44
    %v273 = vpop.f32.mrf.mxu0
    %v274 = vadd.f32 %v254, %v273
    %275 = vdwg.mxu0
    %276 = vmatpush.msra.mxu0 %v143
    %277 = vmatpush.msra.mxu0 %v142
    %278 = vmatpush.msra.mxu0 %v141
    %279 = vmatpush.msra.mxu0 %v140
    %280 = vmatpush.msra.mxu0 %v139
    %281 = vmatpush.msra.mxu0 %v138
    %282 = vmatpush.msra.mxu0 %v137
    %283 = vmatpush.msra.mxu0 %v136
    %284 = vmatpush.msra.mxu0 %v135
    %285 = vmatpush.msra.mxu0 %v134
    %286 = vmatpush.msra.mxu0 %v133
    %287 = vmatpush.msra.mxu0 %v132
    %288 = vmatpush.msra.mxu0 %v131
    %289 = vmatpush.msra.mxu0 %v130
    %290 = vmatpush.msra.mxu0 %v129
    %291 = vmatpush.msra.mxu0 %v128
    %292 = vmatmul.f32.gmra.mxu0 %v45
    %v293 = vpop.f32.mrf.mxu0
    %v294 = vadd.f32 %v274, %v293
    %295 = vdwg.mxu0
    %296 = vmatpush.msra.mxu0 %v159
    %297 = vmatpush.msra.mxu0 %v158
    %298 = vmatpush.msra.mxu0 %v157
    %299 = vmatpush.msra.mxu0 %v156
    %300 = vmatpush.msra.mxu0 %v155
    %301 = vmatpush.msra.mxu0 %v154
    %302 = vmatpush.msra.mxu0 %v153
    %303 = vmatpush.msra.mxu0 %v152
    %304 = vmatpush.msra.mxu0 %v151
    %305 = vmatpush.msra.mxu0 %v150
    %306 = vmatpush.msra.mxu0 %v149
    %307 = vmatpush.msra.mxu0 %v148
    %308 = vmatpush.msra.mxu0 %v147
    %309 = vmatpush.msra.mxu0 %v146
    %310 = vmatpush.msra.mxu0 %v145
    %311 = vmatpush.msra.mxu0 %v144
    %312 = vmatmul.f32.gmra.mxu0 %v46
    %v313 = vpop.f32.mrf.mxu0
    %v314 = vadd.f32 %v294, %v313
    %315 = vdwg.mxu0
    %316 = vmatpush.msra.mxu0 %v175
    %317 = vmatpush.msra.mxu0 %v174
    %318 = vmatpush.msra.mxu0 %v173
    %319 = vmatpush.msra.mxu0 %v172
    %320 = vmatpush.msra.mxu0 %v171
    %321 = vmatpush.msra.mxu0 %v170
    %322 = vmatpush.msra.mxu0 %v169
    %323 = vmatpush.msra.mxu0 %v168
    %324 = vmatpush.msra.mxu0 %v167
    %325 = vmatpush.msra.mxu0 %v166
    %326 = vmatpush.msra.mxu0 %v165
    %327 = vmatpush.msra.mxu0 %v164
    %328 = vmatpush.msra.mxu0 %v163
    %329 = vmatpush.msra.mxu0 %v162
    %330 = vmatpush.msra.mxu0 %v161
    %331 = vmatpush.msra.mxu0 %v160
    %332 = vmatmul.f32.gmra.mxu0 %v47
    %v333 = vpop.f32.mrf.mxu0
    %v334 = vadd.f32 %v314, %v333
    %335 = vdwg.mxu0
    %v336 = vadd.f32 %v39, %v334
    %337 = vst [vmem:[%s3] sm:$0xff] %v336
    // Predicated region
    $region22: #{_lambda_.1} parent=1 // pred_check
      _
    $region23: #{_lambda_.1} parent=1 // pred_check_branch
      %339 = sbr.rel (0) target = $region25
    $region24: #{_lambda_.1} parent=1 // pred_region
      _
    $region25: #{_lambda_.1} parent=1 // pred_fallthru
      _
    // Predicated region
    $region26: #{_lambda_.1} parent=1 // pred_check
      _
    $region27: #{_lambda_.1} parent=1 // pred_check_branch
      %341 = sbr.rel (0) target = $region29
    $region28: #{_lambda_.1} parent=1 // pred_region
      _
    $region29: #{_lambda_.1} parent=1 // pred_fallthru
      _
    %342 = vsyncpa [#allocation3], 1

</llo_original>
